<compile_context>
chip_gen: v7x
topology: tpu7x:2x2x1
jax: 0.10.0
libtpu: 0.0.40
codegen_flags: <defaults>
</compile_context>

<pallas_src>
import functools

import jax
import jax.numpy as jnp
from jax.experimental import pallas as pl
from jax.experimental.pallas import tpu as pltpu


def channel_attention_kernel(x_ref, w1_ref, w2t_ref, o_ref, sum_ref, *, inv_l):
    # x_ref block: (1, C, Lt); w1_ref: (1, H); w2t_ref: (H, O)
    # o_ref block: (1, C, O);  sum_ref scratch: (C, 1) f32
    li = pl.program_id(1)

    @pl.when(li == 0)
    def _():
        sum_ref[...] = jnp.zeros_like(sum_ref)

    # Accumulate the per-channel sum over this L tile (lane-axis reduce -> XLU).
    x = x_ref[0]                                            # (C, Lt)
    sum_ref[...] += jnp.sum(x, axis=1, keepdims=True)       # (C, 1)

    @pl.when(li == pl.num_programs(1) - 1)
    def _():
        mean = sum_ref[...] * inv_l                          # (C, 1)
        # Linear(1, 16, bias=False) + ReLU: broadcast multiply, no relayout.
        hidden = jnp.maximum(mean * w1_ref[...], 0.0)        # (C, H)
        # Linear(16, 94, bias=False): one small MXU matmul.
        y = jnp.dot(hidden, w2t_ref[...],
                    preferred_element_type=jnp.float32)      # (C, O)
        o_ref[0] = jax.nn.sigmoid(y).astype(o_ref.dtype)


def channel_attention(x, w1, w2, *, lt=None):
    """x: (N, C, L) f32; w1: (16, 1) f32 (fc[0].weight); w2: (94, 16) f32 (fc[2].weight)."""
    N, C, L = x.shape
    H = w1.shape[0]
    O = w2.shape[0]
    assert w1.shape == (H, 1) and w2.shape == (O, H)

    # Pick the widest lane tile that keeps VMEM modest (<~1 MiB/block, safe on
    # v5e/v6e/v7x scoped-VMEM defaults even with double buffering).
    if lt is None:
        lt = L if L <= 2048 else 2048
    assert L % lt == 0, "L must be divisible by the L-tile size"
    assert lt % 128 == 0 or lt == L, "lane tile should be 128-aligned"
    n_lt = L // lt

    w1_row = w1.reshape(1, H)        # (1, 16)
    w2t = w2.T                       # (16, 94)  -> avoids in-kernel transpose

    kern = functools.partial(channel_attention_kernel, inv_l=float(1.0 / L))

    flops = N * C * L + 2 * N * C * H + 2 * N * C * H * O
    bytes_accessed = 4 * (N * C * L + N * C * O + H + H * O)

    return pl.pallas_call(
        kern,
        out_shape=jax.ShapeDtypeStruct((N, C, O), x.dtype),
        grid_spec=pltpu.PrefetchScalarGridSpec(
            num_scalar_prefetch=0,
            grid=(N, n_lt),                       # reduction (L) axis last
            in_specs=[
                pl.BlockSpec((1, C, lt), lambda n, l: (n, 0, l)),
                pl.BlockSpec((1, H), lambda n, l: (0, 0)),     # resident
                pl.BlockSpec((H, O), lambda n, l: (0, 0)),     # resident
            ],
            out_specs=pl.BlockSpec((1, C, O), lambda n, l: (n, 0, 0)),
            scratch_shapes=[pltpu.VMEM((C, 1), jnp.float32)],
        ),
        compiler_params=pltpu.CompilerParams(
            dimension_semantics=("parallel", "arbitrary"),
        ),
        cost_estimate=pl.CostEstimate(
            flops=flops,
            transcendentals=N * C * O,
            bytes_accessed=bytes_accessed,
        ),
    )(x, w1_row, w2t)


def channel_attention_ref(x, w1, w2):
    # Pure-JAX reference mirroring the PyTorch module.
    m = x.mean(axis=2, keepdims=True)               # AdaptiveAvgPool1d(1): (N, C, 1)
    h = jnp.maximum(m @ w1.T, 0.0)                  # Linear(1, 16) + ReLU:  (N, C, 16)
    y = h @ w2.T                                    # Linear(16, 94):        (N, C, 94)
    return jax.nn.sigmoid(y)


if __name__ == "__main__":
    # Small deterministic shapes. The fc stack hard-codes 1 -> 16 -> 94.
    N, C, L = 2, 64, 512
    H, O = 16, 94

    key = jax.random.PRNGKey(0)
    kx, k1, k2 = jax.random.split(key, 3)

    x = jax.random.normal(kx, (N, C, L), dtype=jnp.float32)

    # PyTorch nn.Linear default init (uniform +- 1/sqrt(fan_in)), no biases.
    w1 = jax.random.uniform(k1, (H, 1), dtype=jnp.float32, minval=-1.0, maxval=1.0)
    b2 = 1.0 / jnp.sqrt(jnp.float32(H))
    w2 = jax.random.uniform(k2, (O, H), dtype=jnp.float32, minval=-b2, maxval=b2)

    # lt=256 exercises the multi-step L-reduction (grid = (2, 2)).
    out = channel_attention(x, w1, w2, lt=256)
    out = jax.block_until_ready(out)

    ref = channel_attention_ref(x, w1, w2)
    assert out.shape == (N, C, O)
    assert jnp.allclose(out, ref, atol=1e-5, rtol=1e-5), "mismatch vs pure-JAX reference"

    print("KERNEL_OK")
</pallas_src>

<mosaic_0001>
module attributes {stable_mosaic.version = 11 : i64} {
  func.func @channel_attention_kernel(%arg0: i32, %arg1: i32, %arg2: memref<1x64x256xf32, #tpu.memory_space<vmem>>, %arg3: memref<1x16xf32, #tpu.memory_space<vmem>>, %arg4: memref<16x94xf32, #tpu.memory_space<vmem>>, %arg5: memref<1x64x94xf32, #tpu.memory_space<vmem>>, %arg6: memref<64x1xf32, #tpu.memory_space<vmem>>) attributes {dimension_semantics = [#tpu.dimension_semantics<parallel>, #tpu.dimension_semantics<arbitrary>], iteration_bounds = array<i64: 2, 2>, scalar_prefetch = 0 : i64, scratch_operands = 1 : i64, tpu.core_type = #tpu.core_type<tc>, window_params = [{transform_indices = @transform_0, window_bounds = array<i64: 1, 64, 256>}, {pipeline_mode = #tpu.pipeline_mode<synchronous>, transform_indices = @transform_1, window_bounds = array<i64: 1, 16>}, {pipeline_mode = #tpu.pipeline_mode<synchronous>, transform_indices = @transform_2, window_bounds = array<i64: 16, 94>}, {transform_indices = @transform_3, window_bounds = array<i64: 1, 64, 94>}]} {
    %c0_i32 = arith.constant 0 : i32
    %0 = arith.cmpi eq, %arg1, %c0_i32 : i32
    %1 = arith.extui %0 : i1 to i32
    %c0_i32_0 = arith.constant 0 : i32
    %2 = arith.cmpi ne, %1, %c0_i32_0 : i32
    scf.if %2 {
      %cst_8 = arith.constant 0.000000e+00 : f32
      %13 = vector.broadcast %cst_8 : f32 to vector<64x1xf32>
      %c0_9 = arith.constant 0 : index
      %c0_10 = arith.constant 0 : index
      %14 = vector.load %arg6[%c0_9, %c0_10] : memref<64x1xf32, #tpu.memory_space<vmem>>, vector<64x1xf32>
      tpu.vector_store %arg6[%c0_9, %c0_10], %13 {strides = array<i32>} : memref<64x1xf32, #tpu.memory_space<vmem>>, vector<64x1xf32>,
    } else {
    }
    %c0 = arith.constant 0 : index
    %c0_1 = arith.constant 0 : index
    %c0_2 = arith.constant 0 : index
    %3 = vector.load %arg2[%c0, %c0_1, %c0_2] : memref<1x64x256xf32, #tpu.memory_space<vmem>>, vector<1x64x256xf32>
    %4 = vector.shape_cast %3 : vector<1x64x256xf32> to vector<64x256xf32>
    %c0_3 = arith.constant 0 : index
    %c0_4 = arith.constant 0 : index
    %5 = vector.load %arg6[%c0_3, %c0_4] : memref<64x1xf32, #tpu.memory_space<vmem>>, vector<64x1xf32>
    %cst = arith.constant dense<0.000000e+00> : vector<64xf32>
    %6 = vector.multi_reduction <add>, %4, %cst [1] : vector<64x256xf32> to vector<64xf32>
    %7 = vector.shape_cast %6 : vector<64xf32> to vector<64x1xf32>
    %8 = arith.addf %5, %7 : vector<64x1xf32>
    %c0_5 = arith.constant 0 : index
    %c0_6 = arith.constant 0 : index
    %9 = vector.load %arg6[%c0_5, %c0_6] : memref<64x1xf32, #tpu.memory_space<vmem>>, vector<64x1xf32>
    tpu.vector_store %arg6[%c0_5, %c0_6], %8 {strides = array<i32>} : memref<64x1xf32, #tpu.memory_space<vmem>>, vector<64x1xf32>,
    %c1_i32 = arith.constant 1 : i32
    %10 = arith.cmpi eq, %arg1, %c1_i32 : i32
    %11 = arith.extui %10 : i1 to i32
    %c0_i32_7 = arith.constant 0 : i32
    %12 = arith.cmpi ne, %11, %c0_i32_7 : i32
    scf.if %12 {
      %c0_8 = arith.constant 0 : index
      %c0_9 = arith.constant 0 : index
      %13 = vector.load %arg6[%c0_8, %c0_9] : memref<64x1xf32, #tpu.memory_space<vmem>>, vector<64x1xf32>
      %cst_10 = arith.constant 0.001953125 : f32
      %14 = vector.broadcast %cst_10 : f32 to vector<64x1xf32>
      %15 = arith.mulf %13, %14 : vector<64x1xf32>
      %c0_11 = arith.constant 0 : index
      %c0_12 = arith.constant 0 : index
      %16 = vector.load %arg3[%c0_11, %c0_12] : memref<1x16xf32, #tpu.memory_space<vmem>>, vector<1x16xf32>
      %17 = vector.broadcast %15 : vector<64x1xf32> to vector<64x16xf32>
      %18 = vector.broadcast %16 : vector<1x16xf32> to vector<64x16xf32>
      %19 = arith.mulf %17, %18 : vector<64x16xf32>
      %cst_13 = arith.constant 0.000000e+00 : f32
      %20 = vector.broadcast %cst_13 : f32 to vector<64x16xf32>
      %21 = arith.maximumf %19, %20 : vector<64x16xf32>
      %c0_14 = arith.constant 0 : index
      %c0_15 = arith.constant 0 : index
      %22 = vector.load %arg4[%c0_14, %c0_15] : memref<16x94xf32, #tpu.memory_space<vmem>>, vector<16x94xf32>
      %cst_16 = arith.constant dense<0.000000e+00> : vector<64x94xf32>
      %23 = tpu.matmul %21, %22, %cst_16 {dimension_numbers = #tpu.dot_dimension_numbers<[1], [0], [0], [1], [0, 0, 1, 1], [], []>} : vector<64x16xf32>, vector<16x94xf32>, vector<64x94xf32> -> vector<64x94xf32>
      %24 = arith.negf %23 : vector<64x94xf32>
      %25 = math.exp %24 : vector<64x94xf32>
      %cst_17 = arith.constant 1.000000e+00 : f32
      %26 = vector.broadcast %cst_17 : f32 to vector<64x94xf32>
      %27 = arith.addf %26, %25 : vector<64x94xf32>
      %28 = arith.divf %26, %27 : vector<64x94xf32>
      %c0_18 = arith.constant 0 : index
      %c0_19 = arith.constant 0 : index
      %c0_20 = arith.constant 0 : index
      %29 = vector.load %arg5[%c0_18, %c0_19, %c0_20] : memref<1x64x94xf32, #tpu.memory_space<vmem>>, vector<1x64x94xf32>
      %30 = vector.shape_cast %29 : vector<1x64x94xf32> to vector<64x94xf32>
      %31 = vector.shape_cast %28 : vector<64x94xf32> to vector<1x64x94xf32>
      tpu.vector_store %arg5[%c0_18, %c0_19, %c0_20], %31 {strides = array<i32>} : memref<1x64x94xf32, #tpu.memory_space<vmem>>, vector<1x64x94xf32>,
    } else {
    }
    return
  }
  func.func @transform_0(%arg0: i32, %arg1: i32) -> (i32, i32, i32) {
    %c0_i32 = arith.constant 0 : i32
    %c0_i32_0 = arith.constant 0 : i32
    return %arg0, %c0_i32, %arg1 : i32, i32, i32
  }
  func.func @transform_1(%arg0: i32, %arg1: i32) -> (i32, i32) {
    %c0_i32 = arith.constant 0 : i32
    %c0_i32_0 = arith.constant 0 : i32
    %c0_i32_1 = arith.constant 0 : i32
    return %c0_i32, %c0_i32_0 : i32, i32
  }
  func.func @transform_2(%arg0: i32, %arg1: i32) -> (i32, i32) {
    %c0_i32 = arith.constant 0 : i32
    %c0_i32_0 = arith.constant 0 : i32
    %c0_i32_1 = arith.constant 0 : i32
    return %c0_i32, %c0_i32_0 : i32, i32
  }
  func.func @transform_3(%arg0: i32, %arg1: i32) -> (i32, i32, i32) {
    %c0_i32 = arith.constant 0 : i32
    %c0_i32_0 = arith.constant 0 : i32
    %c0_i32_1 = arith.constant 0 : i32
    return %arg0, %c0_i32, %c0_i32_0 : i32, i32, i32
  }
}

</mosaic_0001>

<llo_original>
// kernel: tpu_custom_call.1
$region0: #{tpu_custom_call.1}
  #allocation0 [shape = 'u32[]', space=smem, size = 0x4, offset = 0x4, fixed_abs, tag = 'smem constant byte address 0x4 - core index']
  #allocation1 [shape = 'u32[144,128]{1,0:T(1,128)}', space=vmem, size = 0x12000, scoped, tag = 'internal scratch']
  #allocation2 [shape = 'f32[64,1]{1,0:T(8,128)}', space=vmem, size = 0x8000, scoped, tag = 'scratch operand']
  %s0 = inlined_call_operand.hbm [shape: f32[2,64,512], index: 0, kind: input, shape index: {}]
  %s1 = inlined_call_operand.vmem [shape: f32[1,16], index: 1, kind: input, shape index: {}]
  %s2 = inlined_call_operand.hbm [shape: f32[16,94], index: 2, kind: input, shape index: {}]
  %s3 = inlined_call_operand.hbm [shape: f32[2,64,94], index: 3, kind: output, shape index: {}]
  %s4 = sld [smem:[#allocation0]]
  $region61: #{tpu_custom_call.1} parent=0
    _
  %s6 = ssub.s32 1, %s4
  %s7 = scalar_select 0, %s6, %s4
  $region1: #{tpu_custom_call.1} parent=0
    #allocation3 [shape = 'u8[131072]{0}', space=vmem, size = 0x20000, scoped, tag = 'input window, operand 0']
    #allocation4 [shape = 's32[2]{0}', space=sflag, size = 0x8, scoped, tag = 'scoped memory for tpu_custom_call.1']
    #allocation5 [shape = 's32[2]{0}', space=sflag, size = 0x8, scoped, tag = 'scoped memory for tpu_custom_call.1']
    #allocation6 [shape = 'u8[8192]{0}', space=vmem, size = 0x2000, scoped, tag = 'input window, operand 2, single buffered']
    #allocation7 [shape = 's32[1]{0}', space=sflag, size = 0x4, scoped, tag = 'scoped memory for tpu_custom_call.1']
    #allocation8 [shape = 'u8[65536]{0}', space=vmem, size = 0x10000, scoped, tag = 'output window, operand 0']
    %8 = vsyncpa [#allocation4], 0
    %s9 = scalar_lea.sflag [#allocation4], 1
    %10 = vsyncpa %s9, 0
    %11 = vsyncpa [#allocation7], 0
    %12 = vsyncpa [#allocation5], 0
    %s13 = scalar_lea.sflag [#allocation5], 1
    %14 = vsyncpa %s13, 0
    loop: start=0, step=1, limit=6
    $region2: #{tpu_custom_call.1} parent=1 // loop_pre_header
      _
    $region3: #{tpu_custom_call.1} parent=1 // loop_header
      %s16 = sphi 0, %s20
      %p17 = scmp.ge.s32.totalorder %s16, 6
      %s23 = sphi 0, %s35
      %s24 = sphi 0, %s31
      %s25 = sphi 0, %s23
      %s26 = sphi 0, %s24
      %s27 = sphi 0, %s25
      %s28 = sphi 0, %s26
      %s40 = sphi 0, %s42
      %s43 = sphi 0, %s40
      %s44 = sphi 0, %s43
      %s60 = sphi 0, %s44
      %s64 = sphi 0, %s64
      %s66 = sphi 0, %s64
      %s67 = sphi 0, %s66
      %s81 = sphi 0, %s67
      %s85 = sphi 0, %s85
      %s87 = sphi 0, %s85
      %s88 = sphi 0, %s87
      %s102 = sphi 0, %s88
      %s108 = sphi 0, %s110
      %s111 = sphi 0, %s108
      %s112 = sphi 0, %s111
      %s128 = sphi 0, %s112
    $region4: #{tpu_custom_call.1} parent=1 // loop_header_branch
      %19 = sbr.rel (%p17) target = $region8
    $region5: #{tpu_custom_call.1} parent=1 // loop_body
      %s21 = ssub.s32 %s16, 1
      %s22 = ssub.s32 %s16, 2
      %s29 = sadd.s32 1, %s24
      %p30 = scmp.ge.s32.totalorder %s29, 2
      %s31 = scalar_select %p30, 0, %s29
      %s32 = sadd.s32 1, %s23
      %s33 = scalar_select %p30, %s32, %s23
      %p34 = scmp.ge.s32.totalorder %s33, 2
      %s35 = scalar_select %p34, 0, %s33
      %s36 = ssub.s32 %s23, %s35
      %s37 = ssub.s32 %s24, %s31
      %s38 = sor.u32 %s36, %s37
      %p39 = scmp.eq.s32.totalorder %s38, 0
      %s41 = sadd.s32 %s40, 1
      %s42 = scalar_select %p39, %s40, %s41
      %p45 = pneg %p39
      %p46 = scmp.eq.s32.totalorder %s16, 3
      %p47 = por %p45, %p46
      %p48 = scmp.ne.s32.totalorder %s40, %s43
      %p49 = scmp.eq.s32.totalorder %s16, 0
      %p50 = por %p48, %p49
      %p51 = scmp.ne.s32.totalorder %s40, %s43
      %p52 = scmp.eq.s32.totalorder %s21, 3
      %p53 = por %p51, %p52
      %p54 = scmp.ne.s32.totalorder %s43, %s44
      %p55 = scmp.eq.s32.totalorder %s21, 0
      %p56 = por %p54, %p55
      %p57 = scmp.ne.s32.totalorder %s43, %s44
      %p58 = scmp.eq.s32.totalorder %s22, 3
      %p59 = por %p57, %p58
      %p61 = scmp.ne.s32.totalorder %s44, %s60
      %p62 = scmp.eq.s32.totalorder %s22, 0
      %p63 = por %p61, %p62
      %s65 = sadd.s32 %s64, 1
      %p68 = scmp.eq.s32.totalorder %s16, 3
      %p69 = scmp.ne.s32.totalorder %s64, %s66
      %p70 = scmp.eq.s32.totalorder %s16, 0
      %p71 = por %p69, %p70
      %p72 = scmp.ne.s32.totalorder %s64, %s66
      %p73 = scmp.eq.s32.totalorder %s21, 3
      %p74 = por %p72, %p73
      %p75 = scmp.ne.s32.totalorder %s66, %s67
      %p76 = scmp.eq.s32.totalorder %s21, 0
      %p77 = por %p75, %p76
      %p78 = scmp.ne.s32.totalorder %s66, %s67
      %p79 = scmp.eq.s32.totalorder %s22, 3
      %p80 = por %p78, %p79
      %p82 = scmp.ne.s32.totalorder %s67, %s81
      %p83 = scmp.eq.s32.totalorder %s22, 0
      %p84 = por %p82, %p83
      %s86 = sadd.s32 %s85, 1
      %p89 = scmp.eq.s32.totalorder %s16, 3
      %p90 = scmp.ne.s32.totalorder %s85, %s87
      %p91 = scmp.eq.s32.totalorder %s16, 0
      %p92 = por %p90, %p91
      %p93 = scmp.ne.s32.totalorder %s85, %s87
      %p94 = scmp.eq.s32.totalorder %s21, 3
      %p95 = por %p93, %p94
      %p96 = scmp.ne.s32.totalorder %s87, %s88
      %p97 = scmp.eq.s32.totalorder %s21, 0
      %p98 = por %p96, %p97
      %p99 = scmp.ne.s32.totalorder %s87, %s88
      %p100 = scmp.eq.s32.totalorder %s22, 3
      %p101 = por %p99, %p100
      %p103 = scmp.ne.s32.totalorder %s88, %s102
      %p104 = scmp.eq.s32.totalorder %s22, 0
      %p105 = por %p103, %p104
      %s106 = ssub.s32 %s23, %s35
      %p107 = scmp.eq.s32.totalorder %s106, 0
      %s109 = sadd.s32 %s108, 1
      %s110 = scalar_select %p107, %s108, %s109
      %p113 = pneg %p107
      %p114 = scmp.eq.s32.totalorder %s16, 3
      %p115 = por %p113, %p114
      %p116 = scmp.ne.s32.totalorder %s108, %s111
      %p117 = scmp.eq.s32.totalorder %s16, 0
      %p118 = por %p116, %p117
      %p119 = scmp.ne.s32.totalorder %s108, %s111
      %p120 = scmp.eq.s32.totalorder %s21, 3
      %p121 = por %p119, %p120
      %p122 = scmp.ne.s32.totalorder %s111, %s112
      %p123 = scmp.eq.s32.totalorder %s21, 0
      %p124 = por %p122, %p123
      %p125 = scmp.ne.s32.totalorder %s111, %s112
      %p126 = scmp.eq.s32.totalorder %s22, 3
      %p127 = por %p125, %p126
      %p129 = scmp.ne.s32.totalorder %s112, %s128
      %p130 = scmp.eq.s32.totalorder %s22, 0
      %p131 = por %p129, %p130
      %p132 = scmp.le.s32.totalorder 1, %s16
      %p133 = scmp.lt.s32.totalorder %s16, 5
      %p134 = pnand %p132, %p133
      %p135 = pneg %p134
      // Predicated region
      $region9: #{tpu_custom_call.1} parent=5 // pred_check
        _
      $region10: #{tpu_custom_call.1} parent=5 // pred_check_branch
        %137 = sbr.rel (%p134) target = $region12
      $region11: #{tpu_custom_call.1} parent=5 // pred_region
        %s138 = ssub.s32 %s16, 1
        // Predicated region
        $region13: #{tpu_custom_call.1} parent=11 // pred_check
          %p139 = pneg %p77
        $region14: #{tpu_custom_call.1} parent=11 // pred_check_branch
          %141 = sbr.rel (%p139) target = $region16
        $region15: #{tpu_custom_call.1} parent=11 // pred_region
          _
        $region16: #{tpu_custom_call.1} parent=11 // pred_fallthru
          _
        // Predicated region
        $region17: #{tpu_custom_call.1} parent=11 // pred_check
          %p142 = pneg %p98
        $region18: #{tpu_custom_call.1} parent=11 // pred_check_branch
          %144 = sbr.rel (%p142) target = $region20
        $region19: #{tpu_custom_call.1} parent=11 // pred_region
          %s146 = ssub.s32 256, 256
          %147 = vsyncadd [#allocation7], %s146
          %s148 = sshll.u32 [#allocation6], 4
          %s149 = int_to_ptr.vmem [resolvable:$true] %s148
          %154 = dma.hbm_to_vmem [thread:$0]  %s2, 256, %s149, [#allocation7], 128, 128, 8
        $region20: #{tpu_custom_call.1} parent=11 // pred_fallthru
          _
      $region12: #{tpu_custom_call.1} parent=5 // pred_fallthru
        _
      %p155 = scmp.lt.s32.totalorder %s16, 4
      // Predicated region
      $region21: #{tpu_custom_call.1} parent=5 // pred_check
        %p156 = pneg %p155
      $region22: #{tpu_custom_call.1} parent=5 // pred_check_branch
        %158 = sbr.rel (%p156) target = $region24
      $region23: #{tpu_custom_call.1} parent=5 // pred_region
        // Predicated region
        $region25: #{tpu_custom_call.1} parent=23 // pred_check
          %p159 = pneg %p50
        $region26: #{tpu_custom_call.1} parent=23 // pred_check_branch
          %161 = sbr.rel (%p159) target = $region28
        $region27: #{tpu_custom_call.1} parent=23 // pred_region
          %s162 = sand.u32 %s40, 1
          %s163 = scalar_lea.sflag [#allocation4], %s162
          %s164 = sand.u32 %s40, 1
          %s165 = smul.addr %s164, 128
          %s166 = scalar_lea.vmem [#allocation3], %s165
          %s167 = smul.u32 2, %s24
          %s169 = ssub.s32 2048, 2048
          %170 = vsyncadd %s163, %s169
          %s171 = smul.addr %s23, 32
          %s172 = sadd.s32 %s167, %s171
          %s173 = smul.addr %s172, 128
          %s174 = scalar_lea.hbm %s0, %s173
          %s175 = sshll.u32 %s166, 4
          %s176 = int_to_ptr.vmem [resolvable:$true] %s175
          %181 = dma.hbm_to_vmem [thread:$0]  %s174, 2048, %s176, %s163, 512, 256, 16
        $region28: #{tpu_custom_call.1} parent=23 // pred_fallthru
          _
      $region24: #{tpu_custom_call.1} parent=5 // pred_fallthru
        _
      %p182 = scmp.le.s32.totalorder 1, %s16
      %p183 = scmp.lt.s32.totalorder %s16, 5
      %p184 = pnand %p182, %p183
      %p185 = pneg %p184
      // Predicated region
      $region29: #{tpu_custom_call.1} parent=5 // pred_check
        _
      $region30: #{tpu_custom_call.1} parent=5 // pred_check_branch
        %187 = sbr.rel (%p184) target = $region32
      $region31: #{tpu_custom_call.1} parent=5 // pred_region
        %s188 = ssub.s32 %s16, 1
        %s189 = sand.u32 %s43, 1
        %s190 = scalar_lea.sflag [#allocation4], %s189
        %s191 = sand.u32 %s43, 1
        %s192 = smul.addr %s191, 128
        %s193 = scalar_lea.vmem [#allocation3], %s192
        // Predicated region
        $region33: #{tpu_custom_call.1} parent=31 // pred_check
          %p194 = pneg %p56
        $region34: #{tpu_custom_call.1} parent=31 // pred_check_branch
          %196 = sbr.rel (%p194) target = $region36
        $region35: #{tpu_custom_call.1} parent=31 // pred_region
          %197 = dma.done %s190, 2048
        $region36: #{tpu_custom_call.1} parent=31 // pred_fallthru
          _
        // Predicated region
        $region37: #{tpu_custom_call.1} parent=31 // pred_check
          %p198 = pneg %p98
        $region38: #{tpu_custom_call.1} parent=31 // pred_check_branch
          %200 = sbr.rel (%p198) target = $region40
        $region39: #{tpu_custom_call.1} parent=31 // pred_region
          %201 = dma.done [#allocation7], 256
        $region40: #{tpu_custom_call.1} parent=31 // pred_fallthru
          _
        %s202 = sand.u32 %s43, 1
        %s203 = scalar_lea.sflag [#allocation4], %s202
        %s204 = sand.u32 %s43, 1
        %s205 = smul.addr %s204, 128
        %s206 = scalar_lea.vmem [#allocation3], %s205
        %p207 = pneg %p56
        %p208 = pneg %p53
        %p209 = pneg %p77
        %p210 = pneg %p74
        %p211 = pneg %p98
        %p212 = pneg %p95
        %p213 = pneg %p124
        %p214 = pneg %p121
        %s215 = sand.u32 %s111, 1
        %s216 = scalar_lea.sflag [#allocation5], %s215
        %s217 = sand.u32 %s111, 1
        %s218 = smul.addr %s217, 64
        %s219 = scalar_lea.vmem [#allocation8], %s218
        %s220 = smul.u32 2, %s26
        %p221 = scmp.eq.s32.totalorder %s26, 0
        // Predicated region
        $region41: #{tpu_custom_call.1} parent=31 // pred_check
          %p222 = pneg %p221
        $region42: #{tpu_custom_call.1} parent=31 // pred_check_branch
          %224 = sbr.rel (%p222) target = $region44
        $region43: #{tpu_custom_call.1} parent=31 // pred_region
          %vm225 = vcmask 7168
          %226 = vst.msk [vmem:[#allocation2] sm:$0xff] %vm225, 0.0
          %227 = vst.msk [vmem:[#allocation2 + $0x8] sm:$0xff] %vm225, 0.0
          %228 = vst.msk [vmem:[#allocation2 + $0x10] sm:$0xff] %vm225, 0.0
          %229 = vst.msk [vmem:[#allocation2 + $0x18] sm:$0xff] %vm225, 0.0
          %230 = vst.msk [vmem:[#allocation2 + $0x20] sm:$0xff] %vm225, 0.0
          %231 = vst.msk [vmem:[#allocation2 + $0x28] sm:$0xff] %vm225, 0.0
          %232 = vst.msk [vmem:[#allocation2 + $0x30] sm:$0xff] %vm225, 0.0
          %233 = vst.msk [vmem:[#allocation2 + $0x38] sm:$0xff] %vm225, 0.0
        $region44: #{tpu_custom_call.1} parent=31 // pred_fallthru
          _
        %v234 = vld [vmem:[%s193] sm:$0xff]
        %v235 = vld [vmem:[%s193 + $0x8] sm:$0xff]
        %v236 = vld [vmem:[%s193 + $0x10] sm:$0xff]
        %v237 = vld [vmem:[%s193 + $0x18] sm:$0xff]
        %v238 = vld [vmem:[%s193 + $0x20] sm:$0xff]
        %v239 = vld [vmem:[%s193 + $0x28] sm:$0xff]
        %v240 = vld [vmem:[%s193 + $0x30] sm:$0xff]
        %v241 = vld [vmem:[%s193 + $0x38] sm:$0xff]
        %v242 = vld [vmem:[%s193 + $0x40] sm:$0xff]
        %v243 = vld [vmem:[%s193 + $0x48] sm:$0xff]
        %v244 = vld [vmem:[%s193 + $0x50] sm:$0xff]
        %v245 = vld [vmem:[%s193 + $0x58] sm:$0xff]
        %v246 = vld [vmem:[%s193 + $0x60] sm:$0xff]
        %v247 = vld [vmem:[%s193 + $0x68] sm:$0xff]
        %v248 = vld [vmem:[%s193 + $0x70] sm:$0xff]
        %v249 = vld [vmem:[%s193 + $0x78] sm:$0xff]
        %v250 = vld [vmem:[#allocation2] sm:$0xff]
        %v251 = vld [vmem:[#allocation2 + $0x8] sm:$0xff]
        %v252 = vld [vmem:[#allocation2 + $0x10] sm:$0xff]
        %v253 = vld [vmem:[#allocation2 + $0x18] sm:$0xff]
        %v254 = vld [vmem:[#allocation2 + $0x20] sm:$0xff]
        %v255 = vld [vmem:[#allocation2 + $0x28] sm:$0xff]
        %v256 = vld [vmem:[#allocation2 + $0x30] sm:$0xff]
        %v257 = vld [vmem:[#allocation2 + $0x38] sm:$0xff]
        %v258 = vadd.f32 %v234, %v235
        %259 = vadd.xlane.f32.xlu0 %v258
        %v260 = vpop.xlane.xlu0 %259
        %v261 = vadd.f32 %v236, %v237
        %262 = vadd.xlane.f32.xlu0 %v261
        %v263 = vpop.xlane.xlu0 %262
        %v264 = vadd.f32 %v238, %v239
        %265 = vadd.xlane.f32.xlu0 %v264
        %v266 = vpop.xlane.xlu0 %265
        %v267 = vadd.f32 %v240, %v241
        %268 = vadd.xlane.f32.xlu0 %v267
        %v269 = vpop.xlane.xlu0 %268
        %v270 = vadd.f32 %v242, %v243
        %271 = vadd.xlane.f32.xlu0 %v270
        %v272 = vpop.xlane.xlu0 %271
        %v273 = vadd.f32 %v244, %v245
        %274 = vadd.xlane.f32.xlu0 %v273
        %v275 = vpop.xlane.xlu0 %274
        %v276 = vadd.f32 %v246, %v247
        %277 = vadd.xlane.f32.xlu0 %v276
        %v278 = vpop.xlane.xlu0 %277
        %v279 = vadd.f32 %v248, %v249
        %280 = vadd.xlane.f32.xlu0 %v279
        %v281 = vpop.xlane.xlu0 %280
        %v282 = vadd.f32 %v250, %v260
        %v283 = vadd.f32 %v251, %v263
        %v284 = vadd.f32 %v252, %v266
        %v285 = vadd.f32 %v253, %v269
        %v286 = vadd.f32 %v254, %v272
        %v287 = vadd.f32 %v255, %v275
        %v288 = vadd.f32 %v256, %v278
        %v289 = vadd.f32 %v257, %v281
        %vm290 = vcmask 7168
        %291 = vst.msk [vmem:[#allocation2] sm:$0xff] %vm290, %v282
        %292 = vst.msk [vmem:[#allocation2 + $0x8] sm:$0xff] %vm290, %v283
        %293 = vst.msk [vmem:[#allocation2 + $0x10] sm:$0xff] %vm290, %v284
        %294 = vst.msk [vmem:[#allocation2 + $0x18] sm:$0xff] %vm290, %v285
        %295 = vst.msk [vmem:[#allocation2 + $0x20] sm:$0xff] %vm290, %v286
        %296 = vst.msk [vmem:[#allocation2 + $0x28] sm:$0xff] %vm290, %v287
        %297 = vst.msk [vmem:[#allocation2 + $0x30] sm:$0xff] %vm290, %v288
        %298 = vst.msk [vmem:[#allocation2 + $0x38] sm:$0xff] %vm290, %v289
        %p299 = scmp.eq.s32.totalorder %s26, 1
        // Predicated region
        $region45: #{tpu_custom_call.1} parent=31 // pred_check
          %p300 = pneg %p299
        $region46: #{tpu_custom_call.1} parent=31 // pred_check_branch
          %302 = sbr.rel (%p300) target = $region48
        $region47: #{tpu_custom_call.1} parent=31 // pred_region
          %v303 = vld [vmem:[#allocation2] sm:$0xff]
          %v304 = vld [vmem:[#allocation2 + $0x8] sm:$0xff]
          %v305 = vld [vmem:[#allocation2 + $0x10] sm:$0xff]
          %v306 = vld [vmem:[#allocation2 + $0x18] sm:$0xff]
          %v307 = vld [vmem:[#allocation2 + $0x20] sm:$0xff]
          %v308 = vld [vmem:[#allocation2 + $0x28] sm:$0xff]
          %v309 = vld [vmem:[#allocation2 + $0x30] sm:$0xff]
          %v310 = vld [vmem:[#allocation2 + $0x38] sm:$0xff]
          %v311 = vmul.f32 %v303, 0.001953125
          %v312 = vmul.f32 %v304, 0.001953125
          %v313 = vmul.f32 %v305, 0.001953125
          %v314 = vmul.f32 %v306, 0.001953125
          %v315 = vmul.f32 %v307, 0.001953125
          %v316 = vmul.f32 %v308, 0.001953125
          %v317 = vmul.f32 %v309, 0.001953125
          %v318 = vmul.f32 %v310, 0.001953125
          %v319 = vld [vmem:[%s1] sm:$0x1]
          %321 = vset.pattern.permute.xlu0 0
          %322 = vperm.xlu0 %321, %v311
          %v323 = vpop.permute.xlu0 %322
          %326 = vset.pattern.permute.xlu0 0
          %327 = vperm.xlu0 %326, %v312
          %v328 = vpop.permute.xlu0 %327
          %331 = vset.pattern.permute.xlu0 0
          %332 = vperm.xlu0 %331, %v313
          %v333 = vpop.permute.xlu0 %332
          %336 = vset.pattern.permute.xlu0 0
          %337 = vperm.xlu0 %336, %v314
          %v338 = vpop.permute.xlu0 %337
          %341 = vset.pattern.permute.xlu0 0
          %342 = vperm.xlu0 %341, %v315
          %v343 = vpop.permute.xlu0 %342
          %346 = vset.pattern.permute.xlu0 0
          %347 = vperm.xlu0 %346, %v316
          %v348 = vpop.permute.xlu0 %347
          %351 = vset.pattern.permute.xlu0 0
          %352 = vperm.xlu0 %351, %v317
          %v353 = vpop.permute.xlu0 %352
          %356 = vset.pattern.permute.xlu0 0
          %357 = vperm.xlu0 %356, %v318
          %v358 = vpop.permute.xlu0 %357
          %v361 = vlaneseq
          %v362 = vshrl.u32 %v361, 7
          %v363 = vsub.s32 0, %v362
          %v364 = vrot.slane %v319, %v363
          %v366 = vmul.f32 %v323, %v364
          %v367 = vmul.f32 %v328, %v364
          %v368 = vmul.f32 %v333, %v364
          %v369 = vmul.f32 %v338, %v364
          %v370 = vmul.f32 %v343, %v364
          %v371 = vmul.f32 %v348, %v364
          %v372 = vmul.f32 %v353, %v364
          %v373 = vmul.f32 %v358, %v364
          %v374 = vmax.f32 %v366, 0.0
          %v375 = vmax.f32 %v367, 0.0
          %v376 = vmax.f32 %v368, 0.0
          %v377 = vmax.f32 %v369, 0.0
          %v378 = vmax.f32 %v370, 0.0
          %v379 = vmax.f32 %v371, 0.0
          %v380 = vmax.f32 %v372, 0.0
          %v381 = vmax.f32 %v373, 0.0
          %v382 = vld [vmem:[#allocation6] sm:$0xff]
          %v383 = vld [vmem:[#allocation6 + $0x8] sm:$0xff]
          %vm384 = vcmask 130048
          %v386 = vsel %vm384, %v374, 0
          %v389 = vsel %vm384, %v375, 0
          %v392 = vsel %vm384, %v376, 0
          %v395 = vsel %vm384, %v377, 0
          %v398 = vsel %vm384, %v378, 0
          %v401 = vsel %vm384, %v379, 0
          %v404 = vsel %vm384, %v380, 0
          %v407 = vsel %vm384, %v381, 0
          %409 = vmatprep.subr.mxu0 0.0
          %410 = vmatpush1.msra.mxu0 %v382
          %411 = vmatprep.subr.mxu0 0.0
          %412 = vmatpush1.msra.mxu0 %v383
          %413 = vmatprep.subr.mxu0 0.0
          %414 = vmatpush1.msra.mxu0 0.0
          %415 = vmatprep.subr.mxu0 0.0
          %416 = vmatpush1.msra.mxu0 0.0
          %417 = vmatprep.subr.mxu0 0.0
          %418 = vmatpush1.msra.mxu0 0.0
          %419 = vmatprep.subr.mxu0 0.0
          %420 = vmatpush1.msra.mxu0 0.0
          %421 = vmatprep.subr.mxu0 0.0
          %422 = vmatpush1.msra.mxu0 0.0
          %423 = vmatprep.subr.mxu0 0.0
          %424 = vmatpush1.msra.mxu0 0.0
          %425 = vmatprep.subr.mxu0 0.0
          %426 = vmatpush1.msra.mxu0 0.0
          %427 = vmatprep.subr.mxu0 0.0
          %428 = vmatpush1.msra.mxu0 0.0
          %429 = vmatprep.subr.mxu0 0.0
          %430 = vmatpush1.msra.mxu0 0.0
          %431 = vmatprep.subr.mxu0 0.0
          %432 = vmatpush1.msra.mxu0 0.0
          %433 = vmatprep.subr.mxu0 0.0
          %434 = vmatpush1.msra.mxu0 0.0
          %435 = vmatprep.subr.mxu0 0.0
          %436 = vmatpush1.msra.mxu0 0.0
          %437 = vmatprep.subr.mxu0 0.0
          %438 = vmatpush1.msra.mxu0 0.0
          %439 = vmatprep.subr.mxu0 0.0
          %440 = vmatpush1.msra.mxu0 0.0
          %441 = vmatprep.subr.mxu0 0.0
          %442 = vmatpush1.msra.mxu0 0.0
          %443 = vmatprep.subr.mxu0 0.0
          %444 = vmatpush1.msra.mxu0 0.0
          %445 = vmatprep.subr.mxu0 0.0
          %446 = vmatpush1.msra.mxu0 0.0
          %447 = vmatprep.subr.mxu0 0.0
          %448 = vmatpush1.msra.mxu0 0.0
          %449 = vmatprep.subr.mxu0 0.0
          %450 = vmatpush1.msra.mxu0 0.0
          %451 = vmatprep.subr.mxu0 0.0
          %452 = vmatpush1.msra.mxu0 0.0
          %453 = vmatprep.subr.mxu0 0.0
          %454 = vmatpush1.msra.mxu0 0.0
          %455 = vmatprep.subr.mxu0 0.0
          %456 = vmatpush1.msra.mxu0 0.0
          %457 = vmatprep.subr.mxu0 0.0
          %458 = vmatpush1.msra.mxu0 0.0
          %459 = vmatprep.subr.mxu0 0.0
          %460 = vmatpush1.msra.mxu0 0.0
          %461 = vmatprep.subr.mxu0 0.0
          %462 = vmatpush1.msra.mxu0 0.0
          %463 = vmatprep.subr.mxu0 0.0
          %464 = vmatpush1.msra.mxu0 0.0
          %465 = vmatprep.subr.mxu0 0.0
          %466 = vmatpush1.msra.mxu0 0.0
          %467 = vmatprep.subr.mxu0 0.0
          %468 = vmatpush1.msra.mxu0 0.0
          %469 = vmatprep.subr.mxu0 0.0
          %470 = vmatpush1.msra.mxu0 0.0
          %471 = vmatprep.subr.mxu0 0.0
          %472 = vmatpush1.msra.mxu0 0.0
          %473 = vmatprep.mubr.f32.mxu0 0.0
          %474 = vmatmul.mubr.f32.gmra.mrb[0].mxu0 %v386
          %v475 = vpop.f32.mrb[0].mxu0
          %v476 = vadd.f32 0.0, %v475
          %v477 = vpop.f32.mrb[0].mxu0
          %478 = vmatprep.mubr.f32.mxu0 0.0
          %479 = vmatmul.mubr.f32.gmra.mrb[0].mxu0 %v389
          %v480 = vpop.f32.mrb[0].mxu0
          %v481 = vadd.f32 0.0, %v480
          %v482 = vpop.f32.mrb[0].mxu0
          %483 = vmatprep.mubr.f32.mxu0 0.0
          %484 = vmatmul.mubr.f32.gmra.mrb[0].mxu0 %v392
          %v485 = vpop.f32.mrb[0].mxu0
          %v486 = vadd.f32 0.0, %v485
          %v487 = vpop.f32.mrb[0].mxu0
          %488 = vmatprep.mubr.f32.mxu0 0.0
          %489 = vmatmul.mubr.f32.gmra.mrb[0].mxu0 %v395
          %v490 = vpop.f32.mrb[0].mxu0
          %v491 = vadd.f32 0.0, %v490
          %v492 = vpop.f32.mrb[0].mxu0
          %493 = vmatprep.mubr.f32.mxu0 0.0
          %494 = vmatmul.mubr.f32.gmra.mrb[0].mxu0 %v398
          %v495 = vpop.f32.mrb[0].mxu0
          %v496 = vadd.f32 0.0, %v495
          %v497 = vpop.f32.mrb[0].mxu0
          %498 = vmatprep.mubr.f32.mxu0 0.0
          %499 = vmatmul.mubr.f32.gmra.mrb[0].mxu0 %v401
          %v500 = vpop.f32.mrb[0].mxu0
          %v501 = vadd.f32 0.0, %v500
          %v502 = vpop.f32.mrb[0].mxu0
          %503 = vmatprep.mubr.f32.mxu0 0.0
          %504 = vmatmul.mubr.f32.gmra.mrb[0].mxu0 %v404
          %v505 = vpop.f32.mrb[0].mxu0
          %v506 = vadd.f32 0.0, %v505
          %v507 = vpop.f32.mrb[0].mxu0
          %508 = vmatprep.mubr.f32.mxu0 0.0
          %509 = vmatmul.mubr.f32.gmra.mrb[0].mxu0 %v407
          %v510 = vpop.f32.mrb[0].mxu0
          %v511 = vadd.f32 0.0, %v510
          %v512 = vpop.f32.mrb[0].mxu0
          %513 = vdwg.mxu0
          %v514 = vxor.u32 %v476, 2147483648
          %v515 = vxor.u32 %v481, 2147483648
          %v516 = vxor.u32 %v486, 2147483648
          %v517 = vxor.u32 %v491, 2147483648
          %v518 = vxor.u32 %v496, 2147483648
          %v519 = vxor.u32 %v501, 2147483648
          %v520 = vxor.u32 %v506, 2147483648
          %v521 = vxor.u32 %v511, 2147483648
          %v522 = vmul.f32 %v514, 1.442695
          %v523 = vpow.pop %v522
          %v524 = vmul.f32 %v515, 1.442695
          %v525 = vpow.pop %v524
          %v526 = vmul.f32 %v516, 1.442695
          %v527 = vpow.pop %v526
          %v528 = vmul.f32 %v517, 1.442695
          %v529 = vpow.pop %v528
          %v530 = vmul.f32 %v518, 1.442695
          %v531 = vpow.pop %v530
          %v532 = vmul.f32 %v519, 1.442695
          %v533 = vpow.pop %v532
          %v534 = vmul.f32 %v520, 1.442695
          %v535 = vpow.pop %v534
          %v536 = vmul.f32 %v521, 1.442695
          %v537 = vpow.pop %v536
          %v538 = vadd.f32 %v523, 1.0
          %v539 = vadd.f32 %v525, 1.0
          %v540 = vadd.f32 %v527, 1.0
          %v541 = vadd.f32 %v529, 1.0
          %v542 = vadd.f32 %v531, 1.0
          %v543 = vadd.f32 %v533, 1.0
          %v544 = vadd.f32 %v535, 1.0
          %v545 = vadd.f32 %v537, 1.0
          %v546 = vrcp.pop %v538
          %v547 = vmul.f32 1.0, %v546
          %v548 = vrcp.pop %v539
          %v549 = vmul.f32 1.0, %v548
          %v550 = vrcp.pop %v540
          %v551 = vmul.f32 1.0, %v550
          %v552 = vrcp.pop %v541
          %v553 = vmul.f32 1.0, %v552
          %v554 = vrcp.pop %v542
          %v555 = vmul.f32 1.0, %v554
          %v556 = vrcp.pop %v543
          %v557 = vmul.f32 1.0, %v556
          %v558 = vrcp.pop %v544
          %v559 = vmul.f32 1.0, %v558
          %v560 = vrcp.pop %v545
          %v561 = vmul.f32 1.0, %v560
          %vm562 = vcmask 769024
          %563 = vst.msk [vmem:[%s219] sm:$0xff] %vm562, %v547
          %564 = vst.msk [vmem:[%s219 + $0x8] sm:$0xff] %vm562, %v549
          %565 = vst.msk [vmem:[%s219 + $0x10] sm:$0xff] %vm562, %v551
          %566 = vst.msk [vmem:[%s219 + $0x18] sm:$0xff] %vm562, %v553
          %567 = vst.msk [vmem:[%s219 + $0x20] sm:$0xff] %vm562, %v555
          %568 = vst.msk [vmem:[%s219 + $0x28] sm:$0xff] %vm562, %v557
          %569 = vst.msk [vmem:[%s219 + $0x30] sm:$0xff] %vm562, %v559
          %570 = vst.msk [vmem:[%s219 + $0x38] sm:$0xff] %vm562, %v561
        $region48: #{tpu_custom_call.1} parent=31 // pred_fallthru
          _
        %s571 = sand.u32 %s111, 1
        %s572 = scalar_lea.sflag [#allocation5], %s571
        %s573 = sand.u32 %s111, 1
        %s574 = smul.addr %s573, 64
        %s575 = scalar_lea.vmem [#allocation8], %s574
        // Predicated region
        $region49: #{tpu_custom_call.1} parent=31 // pred_check
          %p576 = pneg %p121
        $region50: #{tpu_custom_call.1} parent=31 // pred_check_branch
          %578 = sbr.rel (%p576) target = $region52
        $region51: #{tpu_custom_call.1} parent=31 // pred_region
          %s580 = ssub.s32 1024, 1024
          %581 = vsyncadd %s572, %s580
          %s582 = smul.addr %s25, 8
          %s583 = smul.addr %s582, 128
          %s584 = scalar_lea.hbm %s3, %s583
          %s585 = sshll.u32 %s575, 4
          %s586 = int_to_ptr.vmem [resolvable:$true] %s585
          %591 = dma.vmem_to_hbm [thread:$0]  %s586, 1024, %s584, %s572, 128, 128, 8
        $region52: #{tpu_custom_call.1} parent=31 // pred_fallthru
          _
      $region32: #{tpu_custom_call.1} parent=5 // pred_fallthru
        _
      %p592 = scmp.le.s32.totalorder 2, %s16
      // Predicated region
      $region53: #{tpu_custom_call.1} parent=5 // pred_check
        %p593 = pneg %p592
      $region54: #{tpu_custom_call.1} parent=5 // pred_check_branch
        %595 = sbr.rel (%p593) target = $region56
      $region55: #{tpu_custom_call.1} parent=5 // pred_region
        %s596 = ssub.s32 %s16, 2
        // Predicated region
        $region57: #{tpu_custom_call.1} parent=55 // pred_check
          %p597 = pneg %p127
        $region58: #{tpu_custom_call.1} parent=55 // pred_check_branch
          %599 = sbr.rel (%p597) target = $region60
        $region59: #{tpu_custom_call.1} parent=55 // pred_region
          %s600 = sand.u32 %s112, 1
          %s601 = scalar_lea.sflag [#allocation5], %s600
          %s602 = sand.u32 %s112, 1
          %s603 = smul.addr %s602, 64
          %s604 = scalar_lea.vmem [#allocation8], %s603
          %605 = dma.done %s601, 1024
        $region60: #{tpu_custom_call.1} parent=55 // pred_fallthru
          _
      $region56: #{tpu_custom_call.1} parent=5 // pred_fallthru
        _
    $region6: #{tpu_custom_call.1} parent=1 // loop_footer
      %s20 = sadd.s32 1, %s16
    $region7: #{tpu_custom_call.1} parent=1 // loop_footer_branch
      %15 = sbr.rel target = $region3
    $region8: #{tpu_custom_call.1} parent=1 // loop_exit
      _
    %606 = vsyncpa [#allocation4], 1
    %s607 = scalar_lea.sflag [#allocation4], 1
    %608 = vsyncpa %s607, 1
    %609 = vsyncpa [#allocation7], 1
    %610 = vsyncpa [#allocation5], 1
    %s611 = scalar_lea.sflag [#allocation5], 1
    %612 = vsyncpa %s611, 1

</llo_original>
